<compile_context>
chip_gen: v7x
topology: tpu7x:2x2x1
jax: 0.10.0
libtpu: 0.0.40
codegen_flags: <defaults>
</compile_context>

<pallas_src>
import functools

import jax
import jax.numpy as jnp
from jax.experimental import pallas as pl
from jax.experimental.pallas import tpu as pltpu

BN_EPS = 1e-5  # nn.BatchNorm1d default


def _round_up(v, mult):
    return (v + mult - 1) // mult * mult


def _vmem_capacity_bytes():
    try:
        return int(pltpu.get_tpu_info().vmem_capacity_bytes)
    except Exception:
        return 64 * 1024 * 1024  # conservative fallback: v7x per-TC VMEM


def _linear_block_kernel(x_ref, w_ref, b_ref, gamma_ref, beta_ref, o_ref,
                         *scratch, tm, m_true, n_tiles, cache_y):
    if cache_y:
        ycache_ref, sum_ref, sumsq_ref, scale_ref, shift_ref = scratch
    else:
        sum_ref, sumsq_ref, scale_ref, shift_ref = scratch
        ycache_ref = None

    p = pl.program_id(0)          # 0 = stats/cache pass, 1 = normalize/apply pass
    m = pl.program_id(1)          # row-tile index
    nm = pl.num_programs(1)
    f_out = o_ref.shape[-1]
    rem = m_true - (n_tiles - 1) * tm   # real rows in the last tile (static)

    def compute_y():
        # Linear + ReLU on the MXU/VPU; f32 accumulation regardless of input dtype.
        y = jnp.dot(x_ref[...], w_ref[...], preferred_element_type=jnp.float32)
        return jnp.maximum(y + b_ref[...], 0.0)

    @pl.when((p == 0) & (m == 0))
    def _init():
        sum_ref[...] = jnp.zeros_like(sum_ref)
        sumsq_ref[...] = jnp.zeros_like(sumsq_ref)

    @pl.when(p == 0)
    def _stats():
        y = compute_y()
        if cache_y:
            ycache_ref[m] = y     # stash unnormalized activations for phase 1

        def accumulate(yv):
            # (8, f_out) accumulators: per-tile accumulation is a pure
            # sublane-aligned VPU add; the 8->1 reduce happens once at finalize.
            yr = yv.reshape(tm // 8, 8, f_out)
            sum_ref[...] += jnp.sum(yr, axis=0)
            sumsq_ref[...] += jnp.sum(yr * yr, axis=0)

        if rem == tm:
            accumulate(y)
        else:
            # Only the last tile carries batch padding -> mask there only.
            @pl.when(m < nm - 1)
            def _full_tile():
                accumulate(y)

            @pl.when(m == nm - 1)
            def _last_tile():
                row = jax.lax.broadcasted_iota(jnp.int32, (tm, 1), 0)
                accumulate(jnp.where(row < rem, y, 0.0))

    @pl.when((p == 0) & (m == nm - 1))
    def _finalize_stats():
        inv_m = 1.0 / float(m_true)
        s = jnp.sum(sum_ref[...], axis=0, keepdims=True)       # 8 -> 1 (XLU, once)
        ss = jnp.sum(sumsq_ref[...], axis=0, keepdims=True)
        mean = s * inv_m
        var = jnp.maximum(ss * inv_m - mean * mean, 0.0)        # biased (train BN)
        scale = gamma_ref[...] * jax.lax.rsqrt(var + BN_EPS)
        scale_ref[...] = scale
        shift_ref[...] = beta_ref[...] - mean * scale

    @pl.when(p == 1)
    def _apply():
        y = ycache_ref[m] if cache_y else compute_y()
        # Dropout: identity (see TODO at top).
        o_ref[...] = y * scale_ref[...] + shift_ref[...]


def linear_block_forward(x, weight, bias, gamma, beta, *, block_rows=2048,
                         input_dtype=None, cache_y=None):
    """x: (N, F_in); weight: (F_out, F_in); bias/gamma/beta: (F_out,)."""
    n, f_in = x.shape
    f_out, f_in_w = weight.shape
    assert f_in_w == f_in

    # Row tiling: 8-sublane aligned, padded batch; feature dims stay full-extent.
    tm = min(block_rows, _round_up(n, 8))
    m_pad = _round_up(n, tm)
    if m_pad != n:
        x = jnp.pad(x, ((0, m_pad - n), (0, 0)))
    n_tiles = m_pad // tm

    w2d = weight.T                        # (F_in, F_out), resident in VMEM
    if input_dtype is not None:           # optional bf16 matmul inputs (v6e/v7x)
        x = x.astype(input_dtype)
        w2d = w2d.astype(input_dtype)
    b2d = bias.reshape(1, f_out).astype(jnp.float32)
    g2d = gamma.reshape(1, f_out).astype(jnp.float32)
    be2d = beta.reshape(1, f_out).astype(jnp.float32)

    # VMEM budget from the actual chip generation (v7x: 64 MiB, v5e/v6e: 128 MiB).
    in_itemsize = jnp.dtype(x.dtype).itemsize
    vmem_limit = int(min(_vmem_capacity_bytes() * 3 // 4, 112 * 1024 * 1024))
    fixed_bytes = (f_in * f_out * in_itemsize        # resident W
                   + 2 * tm * f_in * in_itemsize     # x tile, double-buffered
                   + 2 * tm * f_out * 4              # out tile, double-buffered
                   + 32 * f_out * 4                  # stats / scale / shift scratch
                   + (2 << 20))                      # slack
    if cache_y is None:
        cache_y = fixed_bytes + m_pad * f_out * 4 <= vmem_limit

    if cache_y:
        # Phase 1 reads the cached activations; pin x's block index during
        # phase 1 so x is not re-DMA'd from HBM.
        x_index_map = lambda p, m: ((1 - p) * m, 0)
        scratch = [pltpu.VMEM((n_tiles, tm, f_out), jnp.float32)]  # y cache
    else:
        # Fallback: recompute relu(x @ W + b) in phase 1 (re-streams x tiles).
        x_index_map = lambda p, m: (m, 0)
        scratch = []
    scratch += [
        pltpu.VMEM((8, f_out), jnp.float32),   # partial sums
        pltpu.VMEM((8, f_out), jnp.float32),   # partial sums of squares
        pltpu.VMEM((1, f_out), jnp.float32),   # folded BN scale
        pltpu.VMEM((1, f_out), jnp.float32),   # folded BN shift
    ]

    kernel = functools.partial(_linear_block_kernel, tm=tm, m_true=n,
                               n_tiles=n_tiles, cache_y=cache_y)

    out = pl.pallas_call(
        kernel,
        out_shape=jax.ShapeDtypeStruct((m_pad, f_out), jnp.float32),
        grid_spec=pltpu.PrefetchScalarGridSpec(
            num_scalar_prefetch=0,
            grid=(2, n_tiles),
            in_specs=[
                pl.BlockSpec((tm, f_in), x_index_map),              # x row tile
                pl.BlockSpec((f_in, f_out), lambda p, m: (0, 0)),   # W (resident)
                pl.BlockSpec((1, f_out), lambda p, m: (0, 0)),      # bias
                pl.BlockSpec((1, f_out), lambda p, m: (0, 0)),      # gamma
                pl.BlockSpec((1, f_out), lambda p, m: (0, 0)),      # beta
            ],
            # (p*m, 0): output block 0 stays resident (and unwritten) through the
            # stats phase; each output tile is written to HBM exactly once, in
            # phase 1 (the output index only changes between phase-1 steps, so no
            # unwritten block is ever flushed).
            out_specs=pl.BlockSpec((tm, f_out), lambda p, m: (p * m, 0)),
            scratch_shapes=scratch,
        ),
        compiler_params=pltpu.CompilerParams(
            # Both axes carry the stats-scratch dependency -> sequential.
            dimension_semantics=("arbitrary", "arbitrary"),
            vmem_limit_bytes=vmem_limit,
        ),
    )(x, w2d, b2d, g2d, be2d)

    return out[:n] if m_pad != n else out


def _reference_forward(x, weight, bias, gamma, beta):
    """Pure-JAX reference of the PyTorch forward (train-mode BN, identity dropout)."""
    y = x @ weight.T + bias
    y = jnp.maximum(y, 0.0)
    mean = jnp.mean(y, axis=0, keepdims=True)
    var = jnp.mean((y - mean) ** 2, axis=0, keepdims=True)   # biased variance
    y = (y - mean) * jax.lax.rsqrt(var + BN_EPS)
    return y * gamma + beta


def _run_case(key, n, f_in, f_out, *, block_rows=2048, input_dtype=None,
              cache_y=None, atol=1e-4, rtol=1e-4):
    kx, kw, kb = jax.random.split(key, 3)
    x = jax.random.normal(kx, (n, f_in), dtype=jnp.float32)

    # Linear weight: xavier_uniform_; bias: default U(-1/sqrt(fan_in), 1/sqrt(fan_in))
    xav = (6.0 / (f_in + f_out)) ** 0.5
    weight = jax.random.uniform(kw, (f_out, f_in), jnp.float32, -xav, xav)
    bnd = 1.0 / (f_in ** 0.5)
    bias = jax.random.uniform(kb, (f_out,), jnp.float32, -bnd, bnd)
    # BatchNorm1d affine params at init
    gamma = jnp.ones((f_out,), jnp.float32)
    beta = jnp.zeros((f_out,), jnp.float32)

    out = linear_block_forward(x, weight, bias, gamma, beta,
                               block_rows=block_rows, input_dtype=input_dtype,
                               cache_y=cache_y)
    out = jax.block_until_ready(out)
    ref = _reference_forward(x, weight, bias, gamma, beta)

    assert out.shape == (n, f_out)
    if not jnp.allclose(out, ref, atol=atol, rtol=rtol):
        err = float(jnp.max(jnp.abs(out - ref)))
        raise AssertionError(
            f"Pallas LinearBlock mismatch ({n},{f_in})->({f_out}): max|err|={err}")


if __name__ == "__main__":
    keys = jax.random.split(jax.random.PRNGKey(0), 5)

    # LinearBlock(32, 128, 0.1): single tile, y cached in VMEM, lane-dense stores.
    _run_case(keys[0], n=64, f_in=32, f_out=128)

    # Non-aligned batch + small feature count: row padding + masked BN stats.
    _run_case(keys[1], n=37, f_in=16, f_out=32)

    # Multiple row tiles with a partial last tile, cached-y path.
    _run_case(keys[2], n=200, f_in=32, f_out=128, block_rows=64)

    # Same shapes, forced recompute fallback (activation cache disabled).
    _run_case(keys[3], n=200, f_in=32, f_out=128, block_rows=64, cache_y=False)

    # Optional bf16 matmul inputs (v6e/v7x); stats & BN epilogue stay f32.
    _run_case(keys[4], n=64, f_in=32, f_out=128, input_dtype=jnp.bfloat16,
              atol=2e-1, rtol=5e-2)

    print("KERNEL_OK")
</pallas_src>

<mosaic_0001>
module attributes {stable_mosaic.version = 11 : i64} {
  func.func @_linear_block_kernel(%arg0: i32, %arg1: i32, %arg2: memref<64x32xf32, #tpu.memory_space<vmem>>, %arg3: memref<32x128xf32, #tpu.memory_space<vmem>>, %arg4: memref<1x128xf32, #tpu.memory_space<vmem>>, %arg5: memref<1x128xf32, #tpu.memory_space<vmem>>, %arg6: memref<1x128xf32, #tpu.memory_space<vmem>>, %arg7: memref<64x128xf32, #tpu.memory_space<vmem>>, %arg8: memref<1x64x128xf32, #tpu.memory_space<vmem>>, %arg9: memref<8x128xf32, #tpu.memory_space<vmem>>, %arg10: memref<8x128xf32, #tpu.memory_space<vmem>>, %arg11: memref<1x128xf32, #tpu.memory_space<vmem>>, %arg12: memref<1x128xf32, #tpu.memory_space<vmem>>) attributes {dimension_semantics = [#tpu.dimension_semantics<arbitrary>, #tpu.dimension_semantics<arbitrary>], iteration_bounds = array<i64: 2, 1>, scalar_prefetch = 0 : i64, scratch_operands = 5 : i64, tpu.core_type = #tpu.core_type<tc>, window_params = [{transform_indices = @transform_0, window_bounds = array<i64: 64, 32>}, {pipeline_mode = #tpu.pipeline_mode<synchronous>, transform_indices = @transform_1, window_bounds = array<i64: 32, 128>}, {pipeline_mode = #tpu.pipeline_mode<synchronous>, transform_indices = @transform_2, window_bounds = array<i64: 1, 128>}, {pipeline_mode = #tpu.pipeline_mode<synchronous>, transform_indices = @transform_3, window_bounds = array<i64: 1, 128>}, {pipeline_mode = #tpu.pipeline_mode<synchronous>, transform_indices = @transform_4, window_bounds = array<i64: 1, 128>}, {transform_indices = @transform_5, window_bounds = array<i64: 64, 128>}]} {
    %c0_i32 = arith.constant 0 : i32
    %0 = arith.cmpi eq, %arg0, %c0_i32 : i32
    %c0_i32_0 = arith.constant 0 : i32
    %1 = arith.cmpi eq, %arg1, %c0_i32_0 : i32
    %2 = arith.andi %0, %1 : i1
    %3 = arith.extui %2 : i1 to i32
    %c0_i32_1 = arith.constant 0 : i32
    %4 = arith.cmpi ne, %3, %c0_i32_1 : i32
    scf.if %4 {
      %cst = arith.constant 0.000000e+00 : f32
      %16 = vector.broadcast %cst : f32 to vector<8x128xf32>
      %c0 = arith.constant 0 : index
      %c0_8 = arith.constant 0 : index
      %17 = vector.load %arg9[%c0, %c0_8] : memref<8x128xf32, #tpu.memory_space<vmem>>, vector<8x128xf32>
      tpu.vector_store %arg9[%c0, %c0_8], %16 {strides = array<i32>} : memref<8x128xf32, #tpu.memory_space<vmem>>, vector<8x128xf32>,
      %cst_9 = arith.constant 0.000000e+00 : f32
      %18 = vector.broadcast %cst_9 : f32 to vector<8x128xf32>
      %c0_10 = arith.constant 0 : index
      %c0_11 = arith.constant 0 : index
      %19 = vector.load %arg10[%c0_10, %c0_11] : memref<8x128xf32, #tpu.memory_space<vmem>>, vector<8x128xf32>
      tpu.vector_store %arg10[%c0_10, %c0_11], %18 {strides = array<i32>} : memref<8x128xf32, #tpu.memory_space<vmem>>, vector<8x128xf32>,
    } else {
    }
    %c0_i32_2 = arith.constant 0 : i32
    %5 = arith.cmpi eq, %arg0, %c0_i32_2 : i32
    %6 = arith.extui %5 : i1 to i32
    %c0_i32_3 = arith.constant 0 : i32
    %7 = arith.cmpi ne, %6, %c0_i32_3 : i32
    scf.if %7 {
      %c0 = arith.constant 0 : index
      %c0_8 = arith.constant 0 : index
      %16 = vector.load %arg2[%c0, %c0_8] : memref<64x32xf32, #tpu.memory_space<vmem>>, vector<64x32xf32>
      %c0_9 = arith.constant 0 : index
      %c0_10 = arith.constant 0 : index
      %17 = vector.load %arg3[%c0_9, %c0_10] : memref<32x128xf32, #tpu.memory_space<vmem>>, vector<32x128xf32>
      %cst = arith.constant dense<0.000000e+00> : vector<64x128xf32>
      %18 = tpu.matmul %16, %17, %cst {dimension_numbers = #tpu.dot_dimension_numbers<[1], [0], [0], [1], [0, 0, 1, 1], [], []>} : vector<64x32xf32>, vector<32x128xf32>, vector<64x128xf32> -> vector<64x128xf32>
      %c0_11 = arith.constant 0 : index
      %c0_12 = arith.constant 0 : index
      %19 = vector.load %arg4[%c0_11, %c0_12] : memref<1x128xf32, #tpu.memory_space<vmem>>, vector<1x128xf32>
      %20 = vector.broadcast %19 : vector<1x128xf32> to vector<64x128xf32>
      %21 = arith.addf %18, %20 : vector<64x128xf32>
      %cst_13 = arith.constant 0.000000e+00 : f32
      %22 = vector.broadcast %cst_13 : f32 to vector<64x128xf32>
      %23 = arith.maximumf %21, %22 : vector<64x128xf32>
      %24 = arith.index_cast %arg1 : i32 to index
      %c0_14 = arith.constant 0 : index
      %c0_15 = arith.constant 0 : index
      %25 = vector.load %arg8[%24, %c0_14, %c0_15] : memref<1x64x128xf32, #tpu.memory_space<vmem>>, vector<1x64x128xf32>
      %26 = vector.shape_cast %25 : vector<1x64x128xf32> to vector<64x128xf32>
      %27 = vector.shape_cast %23 : vector<64x128xf32> to vector<1x64x128xf32>
      tpu.vector_store %arg8[%24, %c0_14, %c0_15], %27 {strides = array<i32>} : memref<1x64x128xf32, #tpu.memory_space<vmem>>, vector<1x64x128xf32>,
      %28 = vector.shape_cast %23 : vector<64x128xf32> to vector<8x8x128xf32>
      %c0_16 = arith.constant 0 : index
      %c0_17 = arith.constant 0 : index
      %29 = vector.load %arg9[%c0_16, %c0_17] : memref<8x128xf32, #tpu.memory_space<vmem>>, vector<8x128xf32>
      %cst_18 = arith.constant dense<0.000000e+00> : vector<8x128xf32>
      %30 = vector.multi_reduction <add>, %28, %cst_18 [0] : vector<8x8x128xf32> to vector<8x128xf32>
      %31 = arith.addf %29, %30 : vector<8x128xf32>
      %c0_19 = arith.constant 0 : index
      %c0_20 = arith.constant 0 : index
      %32 = vector.load %arg9[%c0_19, %c0_20] : memref<8x128xf32, #tpu.memory_space<vmem>>, vector<8x128xf32>
      tpu.vector_store %arg9[%c0_19, %c0_20], %31 {strides = array<i32>} : memref<8x128xf32, #tpu.memory_space<vmem>>, vector<8x128xf32>,
      %c0_21 = arith.constant 0 : index
      %c0_22 = arith.constant 0 : index
      %33 = vector.load %arg10[%c0_21, %c0_22] : memref<8x128xf32, #tpu.memory_space<vmem>>, vector<8x128xf32>
      %34 = arith.mulf %28, %28 : vector<8x8x128xf32>
      %cst_23 = arith.constant dense<0.000000e+00> : vector<8x128xf32>
      %35 = vector.multi_reduction <add>, %34, %cst_23 [0] : vector<8x8x128xf32> to vector<8x128xf32>
      %36 = arith.addf %33, %35 : vector<8x128xf32>
      %c0_24 = arith.constant 0 : index
      %c0_25 = arith.constant 0 : index
      %37 = vector.load %arg10[%c0_24, %c0_25] : memref<8x128xf32, #tpu.memory_space<vmem>>, vector<8x128xf32>
      tpu.vector_store %arg10[%c0_24, %c0_25], %36 {strides = array<i32>} : memref<8x128xf32, #tpu.memory_space<vmem>>, vector<8x128xf32>,
    } else {
    }
    %c0_i32_4 = arith.constant 0 : i32
    %8 = arith.cmpi eq, %arg0, %c0_i32_4 : i32
    %c0_i32_5 = arith.constant 0 : i32
    %9 = arith.cmpi eq, %arg1, %c0_i32_5 : i32
    %10 = arith.andi %8, %9 : i1
    %11 = arith.extui %10 : i1 to i32
    %c0_i32_6 = arith.constant 0 : i32
    %12 = arith.cmpi ne, %11, %c0_i32_6 : i32
    scf.if %12 {
      %c0 = arith.constant 0 : index
      %c0_8 = arith.constant 0 : index
      %16 = vector.load %arg9[%c0, %c0_8] : memref<8x128xf32, #tpu.memory_space<vmem>>, vector<8x128xf32>
      %cst = arith.constant dense<0.000000e+00> : vector<128xf32>
      %17 = vector.multi_reduction <add>, %16, %cst [0] : vector<8x128xf32> to vector<128xf32>
      %18 = vector.shape_cast %17 : vector<128xf32> to vector<1x128xf32>
      %c0_9 = arith.constant 0 : index
      %c0_10 = arith.constant 0 : index
      %19 = vector.load %arg10[%c0_9, %c0_10] : memref<8x128xf32, #tpu.memory_space<vmem>>, vector<8x128xf32>
      %cst_11 = arith.constant dense<0.000000e+00> : vector<128xf32>
      %20 = vector.multi_reduction <add>, %19, %cst_11 [0] : vector<8x128xf32> to vector<128xf32>
      %21 = vector.shape_cast %20 : vector<128xf32> to vector<1x128xf32>
      %cst_12 = arith.constant 1.562500e-02 : f32
      %22 = vector.broadcast %cst_12 : f32 to vector<1x128xf32>
      %23 = arith.mulf %18, %22 : vector<1x128xf32>
      %cst_13 = arith.constant 1.562500e-02 : f32
      %24 = vector.broadcast %cst_13 : f32 to vector<1x128xf32>
      %25 = arith.mulf %21, %24 : vector<1x128xf32>
      %26 = arith.mulf %23, %23 : vector<1x128xf32>
      %27 = arith.subf %25, %26 : vector<1x128xf32>
      %cst_14 = arith.constant 0.000000e+00 : f32
      %28 = vector.broadcast %cst_14 : f32 to vector<1x128xf32>
      %29 = arith.maximumf %27, %28 : vector<1x128xf32>
      %c0_15 = arith.constant 0 : index
      %c0_16 = arith.constant 0 : index
      %30 = vector.load %arg5[%c0_15, %c0_16] : memref<1x128xf32, #tpu.memory_space<vmem>>, vector<1x128xf32>
      %cst_17 = arith.constant 9.99999974E-6 : f32
      %31 = vector.broadcast %cst_17 : f32 to vector<1x128xf32>
      %32 = arith.addf %29, %31 : vector<1x128xf32>
      %33 = math.rsqrt %32 : vector<1x128xf32>
      %34 = arith.mulf %30, %33 : vector<1x128xf32>
      %c0_18 = arith.constant 0 : index
      %c0_19 = arith.constant 0 : index
      %35 = vector.load %arg11[%c0_18, %c0_19] : memref<1x128xf32, #tpu.memory_space<vmem>>, vector<1x128xf32>
      tpu.vector_store %arg11[%c0_18, %c0_19], %34 {strides = array<i32>} : memref<1x128xf32, #tpu.memory_space<vmem>>, vector<1x128xf32>,
      %c0_20 = arith.constant 0 : index
      %c0_21 = arith.constant 0 : index
      %36 = vector.load %arg6[%c0_20, %c0_21] : memref<1x128xf32, #tpu.memory_space<vmem>>, vector<1x128xf32>
      %37 = arith.mulf %23, %34 : vector<1x128xf32>
      %38 = arith.subf %36, %37 : vector<1x128xf32>
      %c0_22 = arith.constant 0 : index
      %c0_23 = arith.constant 0 : index
      %39 = vector.load %arg12[%c0_22, %c0_23] : memref<1x128xf32, #tpu.memory_space<vmem>>, vector<1x128xf32>
      tpu.vector_store %arg12[%c0_22, %c0_23], %38 {strides = array<i32>} : memref<1x128xf32, #tpu.memory_space<vmem>>, vector<1x128xf32>,
    } else {
    }
    %c1_i32 = arith.constant 1 : i32
    %13 = arith.cmpi eq, %arg0, %c1_i32 : i32
    %14 = arith.extui %13 : i1 to i32
    %c0_i32_7 = arith.constant 0 : i32
    %15 = arith.cmpi ne, %14, %c0_i32_7 : i32
    scf.if %15 {
      %16 = arith.index_cast %arg1 : i32 to index
      %c0 = arith.constant 0 : index
      %c0_8 = arith.constant 0 : index
      %17 = vector.load %arg8[%16, %c0, %c0_8] : memref<1x64x128xf32, #tpu.memory_space<vmem>>, vector<1x64x128xf32>
      %18 = vector.shape_cast %17 : vector<1x64x128xf32> to vector<64x128xf32>
      %c0_9 = arith.constant 0 : index
      %c0_10 = arith.constant 0 : index
      %19 = vector.load %arg11[%c0_9, %c0_10] : memref<1x128xf32, #tpu.memory_space<vmem>>, vector<1x128xf32>
      %20 = vector.broadcast %19 : vector<1x128xf32> to vector<64x128xf32>
      %21 = arith.mulf %18, %20 : vector<64x128xf32>
      %c0_11 = arith.constant 0 : index
      %c0_12 = arith.constant 0 : index
      %22 = vector.load %arg12[%c0_11, %c0_12] : memref<1x128xf32, #tpu.memory_space<vmem>>, vector<1x128xf32>
      %23 = vector.broadcast %22 : vector<1x128xf32> to vector<64x128xf32>
      %24 = arith.addf %21, %23 : vector<64x128xf32>
      %c0_13 = arith.constant 0 : index
      %c0_14 = arith.constant 0 : index
      %25 = vector.load %arg7[%c0_13, %c0_14] : memref<64x128xf32, #tpu.memory_space<vmem>>, vector<64x128xf32>
      tpu.vector_store %arg7[%c0_13, %c0_14], %24 {strides = array<i32>} : memref<64x128xf32, #tpu.memory_space<vmem>>, vector<64x128xf32>,
    } else {
    }
    return
  }
  func.func @transform_0(%arg0: i32, %arg1: i32) -> (i32, i32) {
    %c1_i32 = arith.constant 1 : i32
    %0 = arith.subi %c1_i32, %arg0 : i32
    %1 = arith.muli %0, %arg1 : i32
    %c0_i32 = arith.constant 0 : i32
    %c0_i32_0 = arith.constant 0 : i32
    return %1, %c0_i32 : i32, i32
  }
  func.func @transform_1(%arg0: i32, %arg1: i32) -> (i32, i32) {
    %c0_i32 = arith.constant 0 : i32
    %c0_i32_0 = arith.constant 0 : i32
    %c0_i32_1 = arith.constant 0 : i32
    return %c0_i32, %c0_i32_0 : i32, i32
  }
  func.func @transform_2(%arg0: i32, %arg1: i32) -> (i32, i32) {
    %c0_i32 = arith.constant 0 : i32
    %c0_i32_0 = arith.constant 0 : i32
    %c0_i32_1 = arith.constant 0 : i32
    return %c0_i32, %c0_i32_0 : i32, i32
  }
  func.func @transform_3(%arg0: i32, %arg1: i32) -> (i32, i32) {
    %c0_i32 = arith.constant 0 : i32
    %c0_i32_0 = arith.constant 0 : i32
    %c0_i32_1 = arith.constant 0 : i32
    return %c0_i32, %c0_i32_0 : i32, i32
  }
  func.func @transform_4(%arg0: i32, %arg1: i32) -> (i32, i32) {
    %c0_i32 = arith.constant 0 : i32
    %c0_i32_0 = arith.constant 0 : i32
    %c0_i32_1 = arith.constant 0 : i32
    return %c0_i32, %c0_i32_0 : i32, i32
  }
  func.func @transform_5(%arg0: i32, %arg1: i32) -> (i32, i32) {
    %0 = arith.muli %arg0, %arg1 : i32
    %c0_i32 = arith.constant 0 : i32
    %c0_i32_0 = arith.constant 0 : i32
    return %0, %c0_i32 : i32, i32
  }
}

</mosaic_0001>

<llo_original>
// kernel: tpu_custom_call.1
$region0: #{tpu_custom_call.1}
  #allocation0 [shape = 'u32[]', space=smem, size = 0x4, offset = 0x4, fixed_abs, tag = 'smem constant byte address 0x4 - core index']
  #allocation1 [shape = 'u32[144,128]{1,0:T(1,128)}', space=vmem, size = 0x12000, scoped, tag = 'internal scratch']
  #allocation2 [shape = 'f32[1,64,128]{2,1,0:T(8,128)}', space=vmem, size = 0x8000, scoped, tag = 'scratch operand']
  #allocation3 [shape = 'f32[8,128]{1,0:T(8,128)}', space=vmem, size = 0x1000, scoped, tag = 'scratch operand']
  #allocation4 [shape = 'f32[8,128]{1,0:T(8,128)}', space=vmem, size = 0x1000, scoped, tag = 'scratch operand']
  #allocation5 [shape = 'f32[1,128]{1,0:T(1,128)}', space=vmem, size = 0x200, scoped, tag = 'scratch operand']
  #allocation6 [shape = 'f32[1,128]{1,0:T(1,128)}', space=vmem, size = 0x200, scoped, tag = 'scratch operand']
  %s0 = inlined_call_operand.vmem [shape: f32[64,32], index: 0, kind: input, shape index: {}]
  %s1 = inlined_call_operand.vmem [shape: f32[32,128], index: 1, kind: input, shape index: {}]
  %s2 = inlined_call_operand.vmem [shape: f32[1,128], index: 2, kind: input, shape index: {}]
  %s3 = inlined_call_operand.vmem [shape: f32[1,128], index: 3, kind: input, shape index: {}]
  %s4 = inlined_call_operand.vmem [shape: f32[1,128], index: 4, kind: input, shape index: {}]
  %s5 = inlined_call_operand.hbm [shape: f32[64,128], index: 5, kind: output, shape index: {}]
  %s6 = sld [smem:[#allocation0]]
  $region69: #{tpu_custom_call.1} parent=0
    _
  %s8 = ssub.s32 1, %s6
  %s9 = scalar_select 0, %s8, %s6
  $region1: #{tpu_custom_call.1} parent=0
    #allocation7 [shape = 'u8[65536]{0}', space=vmem, size = 0x10000, scoped, tag = 'output window, operand 0']
    #allocation8 [shape = 's32[2]{0}', space=sflag, size = 0x8, scoped, tag = 'scoped memory for tpu_custom_call.1']
    %10 = vsyncpa [#allocation8], 0
    %s11 = scalar_lea.sflag [#allocation8], 1
    %12 = vsyncpa %s11, 0
    loop: start=0, step=1, limit=4
    $region2: #{tpu_custom_call.1} parent=1 // loop_pre_header
      _
    $region3: #{tpu_custom_call.1} parent=1 // loop_header
      %s14 = sphi 0, %s18
      %p15 = scmp.ge.s32.totalorder %s14, 4
      %s21 = sphi 0, %s33
      %s22 = sphi 0, %s29
      %s23 = sphi 0, %s21
      %s24 = sphi 0, %s22
      %s25 = sphi 0, %s23
      %s26 = sphi 0, %s24
      %s40 = sphi 0, %s42
      %s43 = sphi 0, %s40
      %s44 = sphi 0, %s43
      %s60 = sphi 0, %s44
      %s64 = sphi 0, %s64
      %s66 = sphi 0, %s64
      %s67 = sphi 0, %s66
      %s81 = sphi 0, %s67
      %s85 = sphi 0, %s85
      %s87 = sphi 0, %s85
      %s88 = sphi 0, %s87
      %s102 = sphi 0, %s88
      %s106 = sphi 0, %s106
      %s108 = sphi 0, %s106
      %s109 = sphi 0, %s108
      %s123 = sphi 0, %s109
      %s127 = sphi 0, %s127
      %s129 = sphi 0, %s127
      %s130 = sphi 0, %s129
      %s144 = sphi 0, %s130
      %s152 = sphi 0, %s154
      %s155 = sphi 0, %s152
      %s156 = sphi 0, %s155
      %s172 = sphi 0, %s156
    $region4: #{tpu_custom_call.1} parent=1 // loop_header_branch
      %17 = sbr.rel (%p15) target = $region8
    $region5: #{tpu_custom_call.1} parent=1 // loop_body
      %s19 = ssub.s32 %s14, 1
      %s20 = ssub.s32 %s14, 2
      %s27 = sadd.s32 1, %s22
      %p28 = scmp.ge.s32.totalorder %s27, 1
      %s29 = scalar_select %p28, 0, %s27
      %s30 = sadd.s32 1, %s21
      %s31 = scalar_select %p28, %s30, %s21
      %p32 = scmp.ge.s32.totalorder %s31, 2
      %s33 = scalar_select %p32, 0, %s31
      %s34 = ssub.s32 1, %s21
      %s35 = smul.u32 %s34, %s22
      %s36 = ssub.s32 1, %s33
      %s37 = smul.u32 %s36, %s29
      %s38 = ssub.s32 %s35, %s37
      %p39 = scmp.eq.s32.totalorder %s38, 0
      %s41 = sadd.s32 %s40, 1
      %s42 = scalar_select %p39, %s40, %s41
      %p45 = pneg %p39
      %p46 = scmp.eq.s32.totalorder %s14, 1
      %p47 = por %p45, %p46
      %p48 = scmp.ne.s32.totalorder %s40, %s43
      %p49 = scmp.eq.s32.totalorder %s14, 0
      %p50 = por %p48, %p49
      %p51 = scmp.ne.s32.totalorder %s40, %s43
      %p52 = scmp.eq.s32.totalorder %s19, 1
      %p53 = por %p51, %p52
      %p54 = scmp.ne.s32.totalorder %s43, %s44
      %p55 = scmp.eq.s32.totalorder %s19, 0
      %p56 = por %p54, %p55
      %p57 = scmp.ne.s32.totalorder %s43, %s44
      %p58 = scmp.eq.s32.totalorder %s20, 1
      %p59 = por %p57, %p58
      %p61 = scmp.ne.s32.totalorder %s44, %s60
      %p62 = scmp.eq.s32.totalorder %s20, 0
      %p63 = por %p61, %p62
      %s65 = sadd.s32 %s64, 1
      %p68 = scmp.eq.s32.totalorder %s14, 1
      %p69 = scmp.ne.s32.totalorder %s64, %s66
      %p70 = scmp.eq.s32.totalorder %s14, 0
      %p71 = por %p69, %p70
      %p72 = scmp.ne.s32.totalorder %s64, %s66
      %p73 = scmp.eq.s32.totalorder %s19, 1
      %p74 = por %p72, %p73
      %p75 = scmp.ne.s32.totalorder %s66, %s67
      %p76 = scmp.eq.s32.totalorder %s19, 0
      %p77 = por %p75, %p76
      %p78 = scmp.ne.s32.totalorder %s66, %s67
      %p79 = scmp.eq.s32.totalorder %s20, 1
      %p80 = por %p78, %p79
      %p82 = scmp.ne.s32.totalorder %s67, %s81
      %p83 = scmp.eq.s32.totalorder %s20, 0
      %p84 = por %p82, %p83
      %s86 = sadd.s32 %s85, 1
      %p89 = scmp.eq.s32.totalorder %s14, 1
      %p90 = scmp.ne.s32.totalorder %s85, %s87
      %p91 = scmp.eq.s32.totalorder %s14, 0
      %p92 = por %p90, %p91
      %p93 = scmp.ne.s32.totalorder %s85, %s87
      %p94 = scmp.eq.s32.totalorder %s19, 1
      %p95 = por %p93, %p94
      %p96 = scmp.ne.s32.totalorder %s87, %s88
      %p97 = scmp.eq.s32.totalorder %s19, 0
      %p98 = por %p96, %p97
      %p99 = scmp.ne.s32.totalorder %s87, %s88
      %p100 = scmp.eq.s32.totalorder %s20, 1
      %p101 = por %p99, %p100
      %p103 = scmp.ne.s32.totalorder %s88, %s102
      %p104 = scmp.eq.s32.totalorder %s20, 0
      %p105 = por %p103, %p104
      %s107 = sadd.s32 %s106, 1
      %p110 = scmp.eq.s32.totalorder %s14, 1
      %p111 = scmp.ne.s32.totalorder %s106, %s108
      %p112 = scmp.eq.s32.totalorder %s14, 0
      %p113 = por %p111, %p112
      %p114 = scmp.ne.s32.totalorder %s106, %s108
      %p115 = scmp.eq.s32.totalorder %s19, 1
      %p116 = por %p114, %p115
      %p117 = scmp.ne.s32.totalorder %s108, %s109
      %p118 = scmp.eq.s32.totalorder %s19, 0
      %p119 = por %p117, %p118
      %p120 = scmp.ne.s32.totalorder %s108, %s109
      %p121 = scmp.eq.s32.totalorder %s20, 1
      %p122 = por %p120, %p121
      %p124 = scmp.ne.s32.totalorder %s109, %s123
      %p125 = scmp.eq.s32.totalorder %s20, 0
      %p126 = por %p124, %p125
      %s128 = sadd.s32 %s127, 1
      %p131 = scmp.eq.s32.totalorder %s14, 1
      %p132 = scmp.ne.s32.totalorder %s127, %s129
      %p133 = scmp.eq.s32.totalorder %s14, 0
      %p134 = por %p132, %p133
      %p135 = scmp.ne.s32.totalorder %s127, %s129
      %p136 = scmp.eq.s32.totalorder %s19, 1
      %p137 = por %p135, %p136
      %p138 = scmp.ne.s32.totalorder %s129, %s130
      %p139 = scmp.eq.s32.totalorder %s19, 0
      %p140 = por %p138, %p139
      %p141 = scmp.ne.s32.totalorder %s129, %s130
      %p142 = scmp.eq.s32.totalorder %s20, 1
      %p143 = por %p141, %p142
      %p145 = scmp.ne.s32.totalorder %s130, %s144
      %p146 = scmp.eq.s32.totalorder %s20, 0
      %p147 = por %p145, %p146
      %s148 = smul.u32 %s21, %s22
      %s149 = smul.u32 %s33, %s29
      %s150 = ssub.s32 %s148, %s149
      %p151 = scmp.eq.s32.totalorder %s150, 0
      %s153 = sadd.s32 %s152, 1
      %s154 = scalar_select %p151, %s152, %s153
      %p157 = pneg %p151
      %p158 = scmp.eq.s32.totalorder %s14, 1
      %p159 = por %p157, %p158
      %p160 = scmp.ne.s32.totalorder %s152, %s155
      %p161 = scmp.eq.s32.totalorder %s14, 0
      %p162 = por %p160, %p161
      %p163 = scmp.ne.s32.totalorder %s152, %s155
      %p164 = scmp.eq.s32.totalorder %s19, 1
      %p165 = por %p163, %p164
      %p166 = scmp.ne.s32.totalorder %s155, %s156
      %p167 = scmp.eq.s32.totalorder %s19, 0
      %p168 = por %p166, %p167
      %p169 = scmp.ne.s32.totalorder %s155, %s156
      %p170 = scmp.eq.s32.totalorder %s20, 1
      %p171 = por %p169, %p170
      %p173 = scmp.ne.s32.totalorder %s156, %s172
      %p174 = scmp.eq.s32.totalorder %s20, 0
      %p175 = por %p173, %p174
      %p176 = scmp.le.s32.totalorder 1, %s14
      %p177 = scmp.lt.s32.totalorder %s14, 3
      %p178 = pnand %p176, %p177
      %p179 = pneg %p178
      // Predicated region
      $region9: #{tpu_custom_call.1} parent=5 // pred_check
        _
      $region10: #{tpu_custom_call.1} parent=5 // pred_check_branch
        %181 = sbr.rel (%p178) target = $region12
      $region11: #{tpu_custom_call.1} parent=5 // pred_region
        %s182 = ssub.s32 %s14, 1
        // Predicated region
        $region13: #{tpu_custom_call.1} parent=11 // pred_check
          %p183 = pneg %p77
        $region14: #{tpu_custom_call.1} parent=11 // pred_check_branch
          %185 = sbr.rel (%p183) target = $region16
        $region15: #{tpu_custom_call.1} parent=11 // pred_region
          _
        $region16: #{tpu_custom_call.1} parent=11 // pred_fallthru
          _
        // Predicated region
        $region17: #{tpu_custom_call.1} parent=11 // pred_check
          %p186 = pneg %p98
        $region18: #{tpu_custom_call.1} parent=11 // pred_check_branch
          %188 = sbr.rel (%p186) target = $region20
        $region19: #{tpu_custom_call.1} parent=11 // pred_region
          _
        $region20: #{tpu_custom_call.1} parent=11 // pred_fallthru
          _
        // Predicated region
        $region21: #{tpu_custom_call.1} parent=11 // pred_check
          %p189 = pneg %p119
        $region22: #{tpu_custom_call.1} parent=11 // pred_check_branch
          %191 = sbr.rel (%p189) target = $region24
        $region23: #{tpu_custom_call.1} parent=11 // pred_region
          _
        $region24: #{tpu_custom_call.1} parent=11 // pred_fallthru
          _
        // Predicated region
        $region25: #{tpu_custom_call.1} parent=11 // pred_check
          %p192 = pneg %p140
        $region26: #{tpu_custom_call.1} parent=11 // pred_check_branch
          %194 = sbr.rel (%p192) target = $region28
        $region27: #{tpu_custom_call.1} parent=11 // pred_region
          _
        $region28: #{tpu_custom_call.1} parent=11 // pred_fallthru
          _
      $region12: #{tpu_custom_call.1} parent=5 // pred_fallthru
        _
      %p195 = scmp.lt.s32.totalorder %s14, 2
      // Predicated region
      $region29: #{tpu_custom_call.1} parent=5 // pred_check
        %p196 = pneg %p195
      $region30: #{tpu_custom_call.1} parent=5 // pred_check_branch
        %198 = sbr.rel (%p196) target = $region32
      $region31: #{tpu_custom_call.1} parent=5 // pred_region
        // Predicated region
        $region33: #{tpu_custom_call.1} parent=31 // pred_check
          %p199 = pneg %p50
        $region34: #{tpu_custom_call.1} parent=31 // pred_check_branch
          %201 = sbr.rel (%p199) target = $region36
        $region35: #{tpu_custom_call.1} parent=31 // pred_region
          %s202 = ssub.s32 1, %s21
          %s203 = smul.u32 %s202, %s22
          %s204 = smul.u32 8, %s203
          %p205 = scmp.lt.s32.totalorder %s204, 7
          %s206 = scalar_select %p205, %s204, 7
          %s207 = smul.addr %s206, 8
          %s208 = scalar_lea.vmem %s0, %s207
          %s209 = ssub.s32 1, %s21
          %s210 = smul.u32 %s209, %s22
          %s211 = smul.u32 8, %s210
        $region36: #{tpu_custom_call.1} parent=31 // pred_fallthru
          _
      $region32: #{tpu_custom_call.1} parent=5 // pred_fallthru
        _
      %p212 = scmp.le.s32.totalorder 1, %s14
      %p213 = scmp.lt.s32.totalorder %s14, 3
      %p214 = pnand %p212, %p213
      %p215 = pneg %p214
      // Predicated region
      $region37: #{tpu_custom_call.1} parent=5 // pred_check
        _
      $region38: #{tpu_custom_call.1} parent=5 // pred_check_branch
        %217 = sbr.rel (%p214) target = $region40
      $region39: #{tpu_custom_call.1} parent=5 // pred_region
        %s218 = ssub.s32 %s14, 1
        %s219 = ssub.s32 1, %s23
        %s220 = smul.u32 %s219, %s24
        %s221 = smul.u32 8, %s220
        %p222 = scmp.lt.s32.totalorder %s221, 7
        %s223 = scalar_select %p222, %s221, 7
        %s224 = smul.addr %s223, 8
        %s225 = scalar_lea.vmem %s0, %s224
        %p226 = pneg %p56
        %p227 = pneg %p53
        %p228 = pneg %p77
        %p229 = pneg %p74
        %p230 = pneg %p98
        %p231 = pneg %p95
        %p232 = pneg %p119
        %p233 = pneg %p116
        %p234 = pneg %p140
        %p235 = pneg %p137
        %p236 = pneg %p168
        %p237 = pneg %p165
        %s238 = sand.u32 %s155, 1
        %s239 = scalar_lea.sflag [#allocation8], %s238
        %s240 = sand.u32 %s155, 1
        %s241 = smul.addr %s240, 64
        %s242 = scalar_lea.vmem [#allocation7], %s241
        %s243 = ssub.s32 1, %s23
        %s244 = smul.u32 %s243, %s24
        %s245 = smul.u32 8, %s244
        %p246 = scmp.lt.s32.totalorder %s245, 7
        %s247 = scalar_select %p246, %s245, 7
        %s248 = smul.addr %s247, 8
        %s249 = scalar_lea.vmem %s0, %s248
        %s250 = ssub.s32 1, %s23
        %s251 = smul.u32 %s250, %s24
        %s252 = smul.u32 8, %s251
        %s253 = smul.u32 %s23, %s24
        %s254 = smul.u32 8, %s253
        %p255 = scmp.eq.s32.totalorder %s23, 0
        %p256 = scmp.eq.s32.totalorder %s24, 0
        %p257 = pnand %p255, %p256
        %p258 = pneg %p257
        // Predicated region
        $region41: #{tpu_custom_call.1} parent=39 // pred_check
          _
        $region42: #{tpu_custom_call.1} parent=39 // pred_check_branch
          %260 = sbr.rel (%p257) target = $region44
        $region43: #{tpu_custom_call.1} parent=39 // pred_region
          %261 = vst [vmem:[#allocation3] sm:$0xff] 0.0
          %262 = vst [vmem:[#allocation4] sm:$0xff] 0.0
        $region44: #{tpu_custom_call.1} parent=39 // pred_fallthru
          _
        // Predicated region
        $region45: #{tpu_custom_call.1} parent=39 // pred_check
          %p263 = pneg %p255
        $region46: #{tpu_custom_call.1} parent=39 // pred_check_branch
          %265 = sbr.rel (%p263) target = $region48
        $region47: #{tpu_custom_call.1} parent=39 // pred_region
          %v266 = vld [vmem:[%s249] sm:$0xff]
          %v267 = vld [vmem:[%s249 + $0x8] sm:$0xff]
          %v268 = vld [vmem:[%s249 + $0x10] sm:$0xff]
          %v269 = vld [vmem:[%s249 + $0x18] sm:$0xff]
          %v270 = vld [vmem:[%s249 + $0x20] sm:$0xff]
          %v271 = vld [vmem:[%s249 + $0x28] sm:$0xff]
          %v272 = vld [vmem:[%s249 + $0x30] sm:$0xff]
          %v273 = vld [vmem:[%s249 + $0x38] sm:$0xff]
          %v274 = vld [vmem:[%s1] sm:$0xff]
          %v275 = vld [vmem:[%s1 + $0x8] sm:$0xff]
          %v276 = vld [vmem:[%s1 + $0x10] sm:$0xff]
          %v277 = vld [vmem:[%s1 + $0x18] sm:$0xff]
          %v278 = vld [vmem:[%s2] sm:$0x1]
          %v280 = vlaneseq
          %v281 = vshrl.u32 %v280, 7
          %v282 = vsub.s32 0, %v281
          %v283 = vrot.slane %v278, %v282
          %vm285 = vcmask 261120
          %v287 = vsel %vm285, %v266, 0
          %v290 = vsel %vm285, %v267, 0
          %v293 = vsel %vm285, %v268, 0
          %v296 = vsel %vm285, %v269, 0
          %v299 = vsel %vm285, %v270, 0
          %v302 = vsel %vm285, %v271, 0
          %v305 = vsel %vm285, %v272, 0
          %v308 = vsel %vm285, %v273, 0
          %310 = vmatprep.subr.mxu0 0.0
          %311 = vmatpush1.msra.mxu0 %v274
          %312 = vmatprep.subr.mxu0 0.0
          %313 = vmatpush1.msra.mxu0 %v275
          %314 = vmatprep.subr.mxu0 0.0
          %315 = vmatpush1.msra.mxu0 %v276
          %316 = vmatprep.subr.mxu0 0.0
          %317 = vmatpush1.msra.mxu0 %v277
          %318 = vmatprep.subr.mxu0 0.0
          %319 = vmatpush1.msra.mxu0 0.0
          %320 = vmatprep.subr.mxu0 0.0
          %321 = vmatpush1.msra.mxu0 0.0
          %322 = vmatprep.subr.mxu0 0.0
          %323 = vmatpush1.msra.mxu0 0.0
          %324 = vmatprep.subr.mxu0 0.0
          %325 = vmatpush1.msra.mxu0 0.0
          %326 = vmatprep.subr.mxu0 0.0
          %327 = vmatpush1.msra.mxu0 0.0
          %328 = vmatprep.subr.mxu0 0.0
          %329 = vmatpush1.msra.mxu0 0.0
          %330 = vmatprep.subr.mxu0 0.0
          %331 = vmatpush1.msra.mxu0 0.0
          %332 = vmatprep.subr.mxu0 0.0
          %333 = vmatpush1.msra.mxu0 0.0
          %334 = vmatprep.subr.mxu0 0.0
          %335 = vmatpush1.msra.mxu0 0.0
          %336 = vmatprep.subr.mxu0 0.0
          %337 = vmatpush1.msra.mxu0 0.0
          %338 = vmatprep.subr.mxu0 0.0
          %339 = vmatpush1.msra.mxu0 0.0
          %340 = vmatprep.subr.mxu0 0.0
          %341 = vmatpush1.msra.mxu0 0.0
          %342 = vmatprep.subr.mxu0 0.0
          %343 = vmatpush1.msra.mxu0 0.0
          %344 = vmatprep.subr.mxu0 0.0
          %345 = vmatpush1.msra.mxu0 0.0
          %346 = vmatprep.subr.mxu0 0.0
          %347 = vmatpush1.msra.mxu0 0.0
          %348 = vmatprep.subr.mxu0 0.0
          %349 = vmatpush1.msra.mxu0 0.0
          %350 = vmatprep.subr.mxu0 0.0
          %351 = vmatpush1.msra.mxu0 0.0
          %352 = vmatprep.subr.mxu0 0.0
          %353 = vmatpush1.msra.mxu0 0.0
          %354 = vmatprep.subr.mxu0 0.0
          %355 = vmatpush1.msra.mxu0 0.0
          %356 = vmatprep.subr.mxu0 0.0
          %357 = vmatpush1.msra.mxu0 0.0
          %358 = vmatprep.subr.mxu0 0.0
          %359 = vmatpush1.msra.mxu0 0.0
          %360 = vmatprep.subr.mxu0 0.0
          %361 = vmatpush1.msra.mxu0 0.0
          %362 = vmatprep.subr.mxu0 0.0
          %363 = vmatpush1.msra.mxu0 0.0
          %364 = vmatprep.subr.mxu0 0.0
          %365 = vmatpush1.msra.mxu0 0.0
          %366 = vmatprep.subr.mxu0 0.0
          %367 = vmatpush1.msra.mxu0 0.0
          %368 = vmatprep.subr.mxu0 0.0
          %369 = vmatpush1.msra.mxu0 0.0
          %370 = vmatprep.subr.mxu0 0.0
          %371 = vmatpush1.msra.mxu0 0.0
          %372 = vmatprep.subr.mxu0 0.0
          %373 = vmatpush1.msra.mxu0 0.0
          %374 = vmatprep.mubr.f32.mxu0 0.0
          %375 = vmatmul.mubr.f32.gmra.mrb[0].mxu0 %v287
          %v376 = vpop.f32.mrb[0].mxu0
          %v377 = vadd.f32 %v283, %v376
          %v378 = vpop.f32.mrb[0].mxu0
          %379 = vmatprep.mubr.f32.mxu0 0.0
          %380 = vmatmul.mubr.f32.gmra.mrb[0].mxu0 %v290
          %v381 = vpop.f32.mrb[0].mxu0
          %v382 = vadd.f32 %v283, %v381
          %v383 = vpop.f32.mrb[0].mxu0
          %384 = vmatprep.mubr.f32.mxu0 0.0
          %385 = vmatmul.mubr.f32.gmra.mrb[0].mxu0 %v293
          %v386 = vpop.f32.mrb[0].mxu0
          %v387 = vadd.f32 %v283, %v386
          %v388 = vpop.f32.mrb[0].mxu0
          %389 = vmatprep.mubr.f32.mxu0 0.0
          %390 = vmatmul.mubr.f32.gmra.mrb[0].mxu0 %v296
          %v391 = vpop.f32.mrb[0].mxu0
          %v392 = vadd.f32 %v283, %v391
          %v393 = vpop.f32.mrb[0].mxu0
          %394 = vmatprep.mubr.f32.mxu0 0.0
          %395 = vmatmul.mubr.f32.gmra.mrb[0].mxu0 %v299
          %v396 = vpop.f32.mrb[0].mxu0
          %v397 = vadd.f32 %v283, %v396
          %v398 = vpop.f32.mrb[0].mxu0
          %399 = vmatprep.mubr.f32.mxu0 0.0
          %400 = vmatmul.mubr.f32.gmra.mrb[0].mxu0 %v302
          %v401 = vpop.f32.mrb[0].mxu0
          %v402 = vadd.f32 %v283, %v401
          %v403 = vpop.f32.mrb[0].mxu0
          %404 = vmatprep.mubr.f32.mxu0 0.0
          %405 = vmatmul.mubr.f32.gmra.mrb[0].mxu0 %v305
          %v406 = vpop.f32.mrb[0].mxu0
          %v407 = vadd.f32 %v283, %v406
          %v408 = vpop.f32.mrb[0].mxu0
          %409 = vmatprep.mubr.f32.mxu0 0.0
          %410 = vmatmul.mubr.f32.gmra.mrb[0].mxu0 %v308
          %v411 = vpop.f32.mrb[0].mxu0
          %v412 = vadd.f32 %v283, %v411
          %v413 = vpop.f32.mrb[0].mxu0
          %414 = vdwg.mxu0
          %v415 = vmax.f32 %v377, 0.0
          %v416 = vmax.f32 %v382, 0.0
          %v417 = vmax.f32 %v387, 0.0
          %v418 = vmax.f32 %v392, 0.0
          %v419 = vmax.f32 %v397, 0.0
          %v420 = vmax.f32 %v402, 0.0
          %v421 = vmax.f32 %v407, 0.0
          %v422 = vmax.f32 %v412, 0.0
          %s423 = smul.u32 %s24, 64
          %s424 = scalar_lea.vmem [#allocation2], %s423
          %425 = vst [vmem:[%s424] sm:$0xff] %v415
          %426 = vst [vmem:[%s424 + $0x8] sm:$0xff] %v416
          %427 = vst [vmem:[%s424 + $0x10] sm:$0xff] %v417
          %428 = vst [vmem:[%s424 + $0x18] sm:$0xff] %v418
          %429 = vst [vmem:[%s424 + $0x20] sm:$0xff] %v419
          %430 = vst [vmem:[%s424 + $0x28] sm:$0xff] %v420
          %431 = vst [vmem:[%s424 + $0x30] sm:$0xff] %v421
          %432 = vst [vmem:[%s424 + $0x38] sm:$0xff] %v422
          %v433 = vld [vmem:[#allocation3] sm:$0xff]
          %v434 = vadd.f32 %v415, %v416
          %v435 = vadd.f32 %v434, %v417
          %v436 = vadd.f32 %v435, %v418
          %v437 = vadd.f32 %v436, %v419
          %v438 = vadd.f32 %v437, %v420
          %v439 = vadd.f32 %v438, %v421
          %v440 = vadd.f32 %v439, %v422
          %v441 = vadd.f32 %v433, %v440
          %442 = vst [vmem:[#allocation3] sm:$0xff] %v441
          %v443 = vld [vmem:[#allocation4] sm:$0xff]
          %v444 = vmul.f32 %v415, %v415
          %v445 = vmul.f32 %v416, %v416
          %v446 = vmul.f32 %v417, %v417
          %v447 = vmul.f32 %v418, %v418
          %v448 = vmul.f32 %v419, %v419
          %v449 = vmul.f32 %v420, %v420
          %v450 = vmul.f32 %v421, %v421
          %v451 = vmul.f32 %v422, %v422
          %v452 = vadd.f32 %v444, %v445
          %v453 = vadd.f32 %v452, %v446
          %v454 = vadd.f32 %v453, %v447
          %v455 = vadd.f32 %v454, %v448
          %v456 = vadd.f32 %v455, %v449
          %v457 = vadd.f32 %v456, %v450
          %v458 = vadd.f32 %v457, %v451
          %v459 = vadd.f32 %v443, %v458
          %460 = vst [vmem:[#allocation4] sm:$0xff] %v459
        $region48: #{tpu_custom_call.1} parent=39 // pred_fallthru
          _
        // Predicated region
        $region49: #{tpu_custom_call.1} parent=39 // pred_check
          _
        $region50: #{tpu_custom_call.1} parent=39 // pred_check_branch
          %462 = sbr.rel (%p257) target = $region52
        $region51: #{tpu_custom_call.1} parent=39 // pred_region
          %v463 = vld [vmem:[#allocation3] sm:$0xff]
          %v464 = vrot.slane %v463, 4
          %v465 = vadd.f32 %v463, %v464
          %v466 = vrot.slane %v465, 2
          %v467 = vadd.f32 %v465, %v466
          %v468 = vrot.slane %v467, 1
          %v469 = vadd.f32 %v467, %v468
          %v470 = vld [vmem:[#allocation4] sm:$0xff]
          %v471 = vrot.slane %v470, 4
          %v472 = vadd.f32 %v470, %v471
          %v473 = vrot.slane %v472, 2
          %v474 = vadd.f32 %v472, %v473
          %v475 = vrot.slane %v474, 1
          %v476 = vadd.f32 %v474, %v475
          %v477 = vmul.f32 %v469, 0.015625
          %v478 = vmul.f32 %v476, 0.015625
          %v479 = vmul.f32 %v477, %v477
          %v480 = vsub.f32 %v478, %v479
          %v481 = vmax.f32 %v480, 0.0
          %v482 = vld [vmem:[%s3] sm:$0x1]
          %v483 = vadd.f32 %v481, 1e-05
          %v484 = vrsqrt.pop %v483
          %v485 = vmul.f32 %v482, %v484
          %486 = vst [vmem:[#allocation5] sm:$0x1] %v485
          %v487 = vld [vmem:[%s4] sm:$0x1]
          %v488 = vmul.f32 %v477, %v485
          %v489 = vsub.f32 %v487, %v488
          %490 = vst [vmem:[#allocation6] sm:$0x1] %v489
        $region52: #{tpu_custom_call.1} parent=39 // pred_fallthru
          _
        %p491 = scmp.eq.s32.totalorder %s23, 1
        // Predicated region
        $region53: #{tpu_custom_call.1} parent=39 // pred_check
          %p492 = pneg %p491
        $region54: #{tpu_custom_call.1} parent=39 // pred_check_branch
          %494 = sbr.rel (%p492) target = $region56
        $region55: #{tpu_custom_call.1} parent=39 // pred_region
          %s495 = smul.u32 %s24, 64
          %s496 = scalar_lea.vmem [#allocation2], %s495
          %v497 = vld [vmem:[%s496] sm:$0xff]
          %v498 = vld [vmem:[%s496 + $0x8] sm:$0xff]
          %v499 = vld [vmem:[%s496 + $0x10] sm:$0xff]
          %v500 = vld [vmem:[%s496 + $0x18] sm:$0xff]
          %v501 = vld [vmem:[%s496 + $0x20] sm:$0xff]
          %v502 = vld [vmem:[%s496 + $0x28] sm:$0xff]
          %v503 = vld [vmem:[%s496 + $0x30] sm:$0xff]
          %v504 = vld [vmem:[%s496 + $0x38] sm:$0xff]
          %v505 = vld [vmem:[#allocation5] sm:$0x1]
          %v507 = vlaneseq
          %v508 = vshrl.u32 %v507, 7
          %v509 = vsub.s32 0, %v508
          %v510 = vrot.slane %v505, %v509
          %v512 = vmul.f32 %v497, %v510
          %v513 = vmul.f32 %v498, %v510
          %v514 = vmul.f32 %v499, %v510
          %v515 = vmul.f32 %v500, %v510
          %v516 = vmul.f32 %v501, %v510
          %v517 = vmul.f32 %v502, %v510
          %v518 = vmul.f32 %v503, %v510
          %v519 = vmul.f32 %v504, %v510
          %v520 = vld [vmem:[#allocation6] sm:$0x1]
          %v522 = vlaneseq
          %v523 = vshrl.u32 %v522, 7
          %v524 = vsub.s32 0, %v523
          %v525 = vrot.slane %v520, %v524
          %v527 = vadd.f32 %v512, %v525
          %v528 = vadd.f32 %v513, %v525
          %v529 = vadd.f32 %v514, %v525
          %v530 = vadd.f32 %v515, %v525
          %v531 = vadd.f32 %v516, %v525
          %v532 = vadd.f32 %v517, %v525
          %v533 = vadd.f32 %v518, %v525
          %v534 = vadd.f32 %v519, %v525
          %535 = vst [vmem:[%s242] sm:$0xff] %v527
          %536 = vst [vmem:[%s242 + $0x8] sm:$0xff] %v528
          %537 = vst [vmem:[%s242 + $0x10] sm:$0xff] %v529
          %538 = vst [vmem:[%s242 + $0x18] sm:$0xff] %v530
          %539 = vst [vmem:[%s242 + $0x20] sm:$0xff] %v531
          %540 = vst [vmem:[%s242 + $0x28] sm:$0xff] %v532
          %541 = vst [vmem:[%s242 + $0x30] sm:$0xff] %v533
          %542 = vst [vmem:[%s242 + $0x38] sm:$0xff] %v534
        $region56: #{tpu_custom_call.1} parent=39 // pred_fallthru
          _
        %s543 = sand.u32 %s155, 1
        %s544 = scalar_lea.sflag [#allocation8], %s543
        %s545 = sand.u32 %s155, 1
        %s546 = smul.addr %s545, 64
        %s547 = scalar_lea.vmem [#allocation7], %s546
        // Predicated region
        $region57: #{tpu_custom_call.1} parent=39 // pred_check
          %p548 = pneg %p165
        $region58: #{tpu_custom_call.1} parent=39 // pred_check_branch
          %550 = sbr.rel (%p548) target = $region60
        $region59: #{tpu_custom_call.1} parent=39 // pred_region
          %s551 = smul.u32 %s23, %s24
          %s552 = smul.u32 8, %s551
          %s554 = ssub.s32 1024, 1024
          %555 = vsyncadd %s544, %s554
          %s556 = smul.addr %s552, 128
          %s557 = scalar_lea.hbm %s5, %s556
          %s558 = sshll.u32 %s547, 4
          %s559 = int_to_ptr.vmem [resolvable:$true] %s558
          %564 = dma.vmem_to_hbm [thread:$0]  %s559, 1024, %s557, %s544, 128, 128, 8
        $region60: #{tpu_custom_call.1} parent=39 // pred_fallthru
          _
      $region40: #{tpu_custom_call.1} parent=5 // pred_fallthru
        _
      %p565 = scmp.le.s32.totalorder 2, %s14
      // Predicated region
      $region61: #{tpu_custom_call.1} parent=5 // pred_check
        %p566 = pneg %p565
      $region62: #{tpu_custom_call.1} parent=5 // pred_check_branch
        %568 = sbr.rel (%p566) target = $region64
      $region63: #{tpu_custom_call.1} parent=5 // pred_region
        %s569 = ssub.s32 %s14, 2
        // Predicated region
        $region65: #{tpu_custom_call.1} parent=63 // pred_check
          %p570 = pneg %p171
        $region66: #{tpu_custom_call.1} parent=63 // pred_check_branch
          %572 = sbr.rel (%p570) target = $region68
        $region67: #{tpu_custom_call.1} parent=63 // pred_region
          %s573 = sand.u32 %s156, 1
          %s574 = scalar_lea.sflag [#allocation8], %s573
          %s575 = sand.u32 %s156, 1
          %s576 = smul.addr %s575, 64
          %s577 = scalar_lea.vmem [#allocation7], %s576
          %578 = dma.done %s574, 1024
        $region68: #{tpu_custom_call.1} parent=63 // pred_fallthru
          _
      $region64: #{tpu_custom_call.1} parent=5 // pred_fallthru
        _
    $region6: #{tpu_custom_call.1} parent=1 // loop_footer
      %s18 = sadd.s32 1, %s14
    $region7: #{tpu_custom_call.1} parent=1 // loop_footer_branch
      %13 = sbr.rel target = $region3
    $region8: #{tpu_custom_call.1} parent=1 // loop_exit
      _
    %579 = vsyncpa [#allocation8], 1
    %s580 = scalar_lea.sflag [#allocation8], 1
    %581 = vsyncpa %s580, 1

</llo_original>
